<compile_context>
chip_gen: v7x
topology: tpu7x:2x2x1
jax: 0.10.0
libtpu: 0.0.40
codegen_flags: <defaults>
</compile_context>

<pallas_src>
import functools

import jax
import jax.numpy as jnp
from jax.experimental import pallas as pl
from jax.experimental.pallas import tpu as pltpu

NEGATIVE_SLOPE = 0.01

_LANE = 128
_VMEM_TILE_BUDGET = 24 << 20        # sized against v7x's 32 MiB default scoped VMEM
_VMEM_LIMIT_BYTES = 48 << 20        # explicit scoped limit (< v7x's 64 MiB physical)
_MAX_BATCH_TILE = 8192
_SINGLE_BUFFER_WEIGHT_BYTES = 4 << 20   # single-buffer resident weights above this
_MAX_PADDED_OUT_ROWS = 8192         # beyond this, padded-output writeback dominates


def _round_up(x, m):
    return ((x + m - 1) // m) * m


def _choose_batch_tile(B, in_dim, layer_widths, weight_vmem_bytes):
    """Size the batch tile from the VMEM budget (not a fixed cap).

    layer_widths: padded output width of each layer (last one = output width).
    """
    x_row = in_dim * 4 * 2                      # f32 x tile, double-buffered
    out_row = layer_widths[-1] * 4 * 2          # f32 out tile, double-buffered
    act_row = max(layer_widths) * 6             # widest f32 activation + bf16 copy
    bytes_per_row = x_row + out_row + act_row
    avail = max(_VMEM_TILE_BUDGET - weight_vmem_bytes, 2 << 20)
    tile = avail // bytes_per_row
    tile = max(16, (tile // 16) * 16)           # multiple of 16 (bf16 packing)
    tile = min(tile, _MAX_BATCH_TILE)
    b16 = _round_up(B, 16)
    if b16 <= tile:
        return b16                              # single grid step for small B
    return tile


def _linear_head_kernel(num_layers, negative_slope, *refs):
    """Fused MLP forward.

    refs = (x_ref, w0_ref, b0_ref, w1_ref, b1_ref, ..., o_ref)
    x is f32 (cast to bf16 here, hidden under DMA/MXU slack); weights are bf16,
    biases f32. Matmuls accumulate in f32 on the MXU; bias add + LeakyReLU run
    in f32 on the VPU; activations are re-cast to bf16 only to feed the next
    MXU pass.
    """
    x_ref = refs[0]
    o_ref = refs[-1]

    h = x_ref[...].astype(jnp.bfloat16)              # fused f32->bf16 cast
    for l in range(num_layers):
        w = refs[1 + 2 * l][...]                     # bf16 [in_ch_p, out_ch_p]
        b = refs[2 + 2 * l][...]                     # f32  [1, out_ch_p]
        acc = jnp.dot(h, w, preferred_element_type=jnp.float32) + b
        if l < num_layers - 1:                       # activation on all but last
            acc = jnp.maximum(acc, negative_slope * acc)   # LeakyReLU (0<slope<1)
            h = acc.astype(jnp.bfloat16)             # feed next MXU pass in bf16
        else:
            h = acc                                  # final logits stay f32
    o_ref[...] = h.astype(o_ref.dtype)


def linear_head_forward(x, params, *, negative_slope=NEGATIVE_SLOPE,
                        batch_tile=None):
    """Run the fused LinerarHead forward pass with a Pallas kernel.

    Args:
      x:      [B, in_channels] float32.
      params: list of (W, b) with W: [in_ch, out_ch], b: [1, out_ch].
      batch_tile: optional override (multiple of 16).
    Returns:
      [B, out_channels] logits (same dtype as x).
    """
    B, in_dim = x.shape
    num_layers = len(params)
    out_dim = params[-1][0].shape[1]

    # ---- padded channel plan: lane-dense hidden dims, optionally lane-dense out
    channels = [in_dim] + [w.shape[1] for w, _ in params]
    pad_out = (out_dim % _LANE != 0) and (_round_up(B, 16) <= _MAX_PADDED_OUT_ROWS)
    padded = [in_dim]                                 # keep x's feature dim as-is
    for l, c in enumerate(channels[1:]):
        is_last = (l == num_layers - 1)
        if is_last:
            padded.append(_round_up(c, _LANE) if pad_out else c)
        else:
            padded.append(_round_up(c, _LANE))        # latent dims -> lane-dense
    out_pad = padded[-1]

    # ---- resident-weight VMEM footprint + buffering decision
    single_buffer = []
    weight_vmem = 0
    for l in range(num_layers):
        cin_p, cout_p = padded[l], padded[l + 1]
        w_bytes = cin_p * cout_p * 2 + cout_p * 4
        sb = w_bytes > _SINGLE_BUFFER_WEIGHT_BYTES    # fetched once -> 1 buf is safe
        single_buffer.append(sb)
        weight_vmem += (1 if sb else 2) * w_bytes

    layer_widths = padded[1:]
    if batch_tile is None:
        batch_tile = _choose_batch_tile(B, in_dim, layer_widths, weight_vmem)
    assert batch_tile % 16 == 0, "batch tile must be a multiple of 16 (bf16 packing)"

    # Pad the batch only when it does not divide the tile (avoids an extra HBM pass).
    B_pad = _round_up(B, batch_tile)
    x_in = x if B_pad == B else jnp.pad(x, ((0, B_pad - B), (0, 0)))

    kernel = functools.partial(_linear_head_kernel, num_layers, negative_slope)

    # x is tiled along the batch axis; weights/biases use a constant block index
    # so Pallas DMAs them once and keeps them resident in VMEM.
    in_specs = [pl.BlockSpec((batch_tile, in_dim), lambda i: (i, 0))]
    args = [x_in]
    flops = 0
    bytes_accessed = x_in.size * 4                    # f32 x read
    for l, (w, b) in enumerate(params):
        cin, cout = w.shape
        cin_p, cout_p = padded[l], padded[l + 1]
        w_p = jnp.pad(w, ((0, cin_p - cin), (0, cout_p - cout))).astype(jnp.bfloat16)
        b_p = jnp.pad(b.reshape(1, cout),
                      ((0, 0), (0, cout_p - cout))).astype(jnp.float32)
        if single_buffer[l]:
            w_spec = pl.BlockSpec((cin_p, cout_p), lambda i: (0, 0),
                                  pipeline_mode=pl.Buffered(1))
            b_spec = pl.BlockSpec((1, cout_p), lambda i: (0, 0),
                                  pipeline_mode=pl.Buffered(1))
        else:
            w_spec = pl.BlockSpec((cin_p, cout_p), lambda i: (0, 0))
            b_spec = pl.BlockSpec((1, cout_p), lambda i: (0, 0))
        in_specs.append(w_spec)
        in_specs.append(b_spec)
        args.append(w_p)
        args.append(b_p)
        flops += 2 * B_pad * cin_p * cout_p
        bytes_accessed += w_p.size * 2 + b_p.size * 4
    bytes_accessed += B_pad * out_pad * x.dtype.itemsize

    out_specs = pl.BlockSpec((batch_tile, out_pad), lambda i: (i, 0))

    out = pl.pallas_call(
        kernel,
        out_shape=jax.ShapeDtypeStruct((B_pad, out_pad), x.dtype),
        grid_spec=pltpu.PrefetchScalarGridSpec(
            num_scalar_prefetch=0,
            grid=(B_pad // batch_tile,),
            in_specs=in_specs,
            out_specs=out_specs,
        ),
        compiler_params=pltpu.CompilerParams(
            dimension_semantics=("parallel",),
            vmem_limit_bytes=_VMEM_LIMIT_BYTES),
        cost_estimate=pl.CostEstimate(
            flops=flops, transcendentals=0, bytes_accessed=bytes_accessed),
    )(*args)

    if B_pad != B or out_pad != out_dim:
        out = out[:B, :out_dim]
    return out


def init_linear_head_params(key, in_channels, out_channels, latent_channels=()):
    """Deterministic synthetic init (shapes match nn.Linear layers, transposed)."""
    channels = [in_channels, *latent_channels, out_channels]
    params = []
    for in_ch, out_ch in zip(channels[:-1], channels[1:]):
        key, kw, kb = jax.random.split(key, 3)
        scale = 1.0 / jnp.sqrt(jnp.float32(in_ch))
        w = jax.random.uniform(kw, (in_ch, out_ch), jnp.float32, -scale, scale)
        b = jax.random.uniform(kb, (1, out_ch), jnp.float32, -scale, scale)
        params.append((w, b))
    return params


def linear_head_reference(x, params, negative_slope=NEGATIVE_SLOPE):
    """Pure-JAX f32 reference for correctness checking."""
    h = x
    for l, (w, b) in enumerate(params):
        h = h @ w + b
        if l < len(params) - 1:
            h = jnp.where(h >= 0, h, negative_slope * h)
    return h


if __name__ == "__main__":
    key = jax.random.PRNGKey(0)

    # Small shapes consistent with the module: embeddings classification head.
    B = 32
    in_channels = 32
    latent_channels = (64, 48)
    out_channels = 16

    kx, kp = jax.random.split(key)
    x = jax.random.normal(kx, (B, in_channels), dtype=jnp.float32)
    params = init_linear_head_params(kp, in_channels, out_channels, latent_channels)

    out = linear_head_forward(x, params)
    out = jax.block_until_ready(out)

    ref = linear_head_reference(x, params)
    assert out.shape == (B, out_channels)
    # bf16 MXU inputs (f32 accumulation) => ~1e-2 relative error vs f32 ref.
    assert jnp.allclose(out, ref, atol=5e-2, rtol=5e-2), "mismatch vs reference"

    print("KERNEL_OK")
</pallas_src>

<mosaic_0001>
module attributes {stable_mosaic.version = 11 : i64} {
  func.func @_linear_head_kernel(%arg0: i32, %arg1: memref<32x32xf32, #tpu.memory_space<vmem>>, %arg2: memref<32x128xbf16, #tpu.memory_space<vmem>>, %arg3: memref<1x128xf32, #tpu.memory_space<vmem>>, %arg4: memref<128x128xbf16, #tpu.memory_space<vmem>>, %arg5: memref<1x128xf32, #tpu.memory_space<vmem>>, %arg6: memref<128x128xbf16, #tpu.memory_space<vmem>>, %arg7: memref<1x128xf32, #tpu.memory_space<vmem>>, %arg8: memref<32x128xf32, #tpu.memory_space<vmem>>) attributes {dimension_semantics = [#tpu.dimension_semantics<parallel>], iteration_bounds = array<i64: 1>, scalar_prefetch = 0 : i64, scratch_operands = 0 : i64, tpu.core_type = #tpu.core_type<tc>, window_params = [{transform_indices = @transform_0, window_bounds = array<i64: 32, 32>}, {pipeline_mode = #tpu.pipeline_mode<synchronous>, transform_indices = @transform_1, window_bounds = array<i64: 32, 128>}, {pipeline_mode = #tpu.pipeline_mode<synchronous>, transform_indices = @transform_2, window_bounds = array<i64: 1, 128>}, {pipeline_mode = #tpu.pipeline_mode<synchronous>, transform_indices = @transform_3, window_bounds = array<i64: 128, 128>}, {pipeline_mode = #tpu.pipeline_mode<synchronous>, transform_indices = @transform_4, window_bounds = array<i64: 1, 128>}, {pipeline_mode = #tpu.pipeline_mode<synchronous>, transform_indices = @transform_5, window_bounds = array<i64: 128, 128>}, {pipeline_mode = #tpu.pipeline_mode<synchronous>, transform_indices = @transform_6, window_bounds = array<i64: 1, 128>}, {transform_indices = @transform_7, window_bounds = array<i64: 32, 128>}]} {
    %c0 = arith.constant 0 : index
    %c0_0 = arith.constant 0 : index
    %0 = vector.load %arg1[%c0, %c0_0] : memref<32x32xf32, #tpu.memory_space<vmem>>, vector<32x32xf32>
    %1 = arith.truncf %0 : vector<32x32xf32> to vector<32x32xbf16>
    %c0_1 = arith.constant 0 : index
    %c0_2 = arith.constant 0 : index
    %2 = vector.load %arg2[%c0_1, %c0_2] : memref<32x128xbf16, #tpu.memory_space<vmem>>, vector<32x128xbf16>
    %c0_3 = arith.constant 0 : index
    %c0_4 = arith.constant 0 : index
    %3 = vector.load %arg3[%c0_3, %c0_4] : memref<1x128xf32, #tpu.memory_space<vmem>>, vector<1x128xf32>
    %cst = arith.constant dense<0.000000e+00> : vector<32x128xf32>
    %4 = tpu.matmul %1, %2, %cst {dimension_numbers = #tpu.dot_dimension_numbers<[1], [0], [0], [1], [0, 0, 1, 1], [], []>} : vector<32x32xbf16>, vector<32x128xbf16>, vector<32x128xf32> -> vector<32x128xf32>
    %5 = vector.broadcast %3 : vector<1x128xf32> to vector<32x128xf32>
    %6 = arith.addf %4, %5 : vector<32x128xf32>
    %cst_5 = arith.constant 0.00999999977 : f32
    %7 = vector.broadcast %cst_5 : f32 to vector<32x128xf32>
    %8 = arith.mulf %7, %6 : vector<32x128xf32>
    %9 = arith.maximumf %6, %8 : vector<32x128xf32>
    %10 = arith.truncf %9 : vector<32x128xf32> to vector<32x128xbf16>
    %c0_6 = arith.constant 0 : index
    %c0_7 = arith.constant 0 : index
    %11 = vector.load %arg4[%c0_6, %c0_7] : memref<128x128xbf16, #tpu.memory_space<vmem>>, vector<128x128xbf16>
    %c0_8 = arith.constant 0 : index
    %c0_9 = arith.constant 0 : index
    %12 = vector.load %arg5[%c0_8, %c0_9] : memref<1x128xf32, #tpu.memory_space<vmem>>, vector<1x128xf32>
    %cst_10 = arith.constant dense<0.000000e+00> : vector<32x128xf32>
    %13 = tpu.matmul %10, %11, %cst_10 {dimension_numbers = #tpu.dot_dimension_numbers<[1], [0], [0], [1], [0, 0, 1, 1], [], []>} : vector<32x128xbf16>, vector<128x128xbf16>, vector<32x128xf32> -> vector<32x128xf32>
    %14 = vector.broadcast %12 : vector<1x128xf32> to vector<32x128xf32>
    %15 = arith.addf %13, %14 : vector<32x128xf32>
    %cst_11 = arith.constant 0.00999999977 : f32
    %16 = vector.broadcast %cst_11 : f32 to vector<32x128xf32>
    %17 = arith.mulf %16, %15 : vector<32x128xf32>
    %18 = arith.maximumf %15, %17 : vector<32x128xf32>
    %19 = arith.truncf %18 : vector<32x128xf32> to vector<32x128xbf16>
    %c0_12 = arith.constant 0 : index
    %c0_13 = arith.constant 0 : index
    %20 = vector.load %arg6[%c0_12, %c0_13] : memref<128x128xbf16, #tpu.memory_space<vmem>>, vector<128x128xbf16>
    %c0_14 = arith.constant 0 : index
    %c0_15 = arith.constant 0 : index
    %21 = vector.load %arg7[%c0_14, %c0_15] : memref<1x128xf32, #tpu.memory_space<vmem>>, vector<1x128xf32>
    %cst_16 = arith.constant dense<0.000000e+00> : vector<32x128xf32>
    %22 = tpu.matmul %19, %20, %cst_16 {dimension_numbers = #tpu.dot_dimension_numbers<[1], [0], [0], [1], [0, 0, 1, 1], [], []>} : vector<32x128xbf16>, vector<128x128xbf16>, vector<32x128xf32> -> vector<32x128xf32>
    %23 = vector.broadcast %21 : vector<1x128xf32> to vector<32x128xf32>
    %24 = arith.addf %22, %23 : vector<32x128xf32>
    %c0_17 = arith.constant 0 : index
    %c0_18 = arith.constant 0 : index
    %25 = vector.load %arg8[%c0_17, %c0_18] : memref<32x128xf32, #tpu.memory_space<vmem>>, vector<32x128xf32>
    tpu.vector_store %arg8[%c0_17, %c0_18], %24 {strides = array<i32>} : memref<32x128xf32, #tpu.memory_space<vmem>>, vector<32x128xf32>,
    return
  }
  func.func @transform_0(%arg0: i32) -> (i32, i32) {
    %c0_i32 = arith.constant 0 : i32
    %c0_i32_0 = arith.constant 0 : i32
    return %arg0, %c0_i32 : i32, i32
  }
  func.func @transform_1(%arg0: i32) -> (i32, i32) {
    %c0_i32 = arith.constant 0 : i32
    %c0_i32_0 = arith.constant 0 : i32
    %c0_i32_1 = arith.constant 0 : i32
    return %c0_i32, %c0_i32_0 : i32, i32
  }
  func.func @transform_2(%arg0: i32) -> (i32, i32) {
    %c0_i32 = arith.constant 0 : i32
    %c0_i32_0 = arith.constant 0 : i32
    %c0_i32_1 = arith.constant 0 : i32
    return %c0_i32, %c0_i32_0 : i32, i32
  }
  func.func @transform_3(%arg0: i32) -> (i32, i32) {
    %c0_i32 = arith.constant 0 : i32
    %c0_i32_0 = arith.constant 0 : i32
    %c0_i32_1 = arith.constant 0 : i32
    return %c0_i32, %c0_i32_0 : i32, i32
  }
  func.func @transform_4(%arg0: i32) -> (i32, i32) {
    %c0_i32 = arith.constant 0 : i32
    %c0_i32_0 = arith.constant 0 : i32
    %c0_i32_1 = arith.constant 0 : i32
    return %c0_i32, %c0_i32_0 : i32, i32
  }
  func.func @transform_5(%arg0: i32) -> (i32, i32) {
    %c0_i32 = arith.constant 0 : i32
    %c0_i32_0 = arith.constant 0 : i32
    %c0_i32_1 = arith.constant 0 : i32
    return %c0_i32, %c0_i32_0 : i32, i32
  }
  func.func @transform_6(%arg0: i32) -> (i32, i32) {
    %c0_i32 = arith.constant 0 : i32
    %c0_i32_0 = arith.constant 0 : i32
    %c0_i32_1 = arith.constant 0 : i32
    return %c0_i32, %c0_i32_0 : i32, i32
  }
  func.func @transform_7(%arg0: i32) -> (i32, i32) {
    %c0_i32 = arith.constant 0 : i32
    %c0_i32_0 = arith.constant 0 : i32
    return %arg0, %c0_i32 : i32, i32
  }
}

</mosaic_0001>

<llo_original>
// kernel: tpu_custom_call.1
$region0: #{tpu_custom_call.1}
  #allocation0 [shape = 'u32[]', space=smem, size = 0x4, offset = 0x4, fixed_abs, tag = 'smem constant byte address 0x4 - core index']
  #allocation1 [shape = 'u32[144,128]{1,0:T(1,128)}', space=vmem, size = 0x12000, scoped, tag = 'internal scratch']
  %s0 = inlined_call_operand.hbm [shape: f32[32,32], index: 0, kind: input, shape index: {}]
  %s1 = inlined_call_operand.hbm [shape: bf16[32,128], index: 1, kind: input, shape index: {}]
  %s2 = inlined_call_operand.vmem [shape: f32[1,128], index: 2, kind: input, shape index: {}]
  %s3 = inlined_call_operand.hbm [shape: bf16[128,128], index: 3, kind: input, shape index: {}]
  %s4 = inlined_call_operand.vmem [shape: f32[1,128], index: 4, kind: input, shape index: {}]
  %s5 = inlined_call_operand.hbm [shape: bf16[128,128], index: 5, kind: input, shape index: {}]
  %s6 = inlined_call_operand.vmem [shape: f32[1,128], index: 6, kind: input, shape index: {}]
  %s7 = inlined_call_operand.hbm [shape: f32[32,128], index: 7, kind: output, shape index: {}]
  %s8 = sld [smem:[#allocation0]]
  $region54: #{tpu_custom_call.1} parent=0
    _
  %s10 = ssub.s32 1, %s8
  %s11 = scalar_select 0, %s10, %s8
  $region1: #{tpu_custom_call.1} parent=0
    #allocation2 [shape = 'u8[16384]{0}', space=vmem, size = 0x4000, scoped, tag = 'input window, operand 0, single buffered']
    #allocation3 [shape = 's32[1]{0}', space=sflag, size = 0x4, scoped, tag = 'scoped memory for tpu_custom_call.1']
    #allocation4 [shape = 's32[1]{0}', space=sflag, size = 0x4, scoped, tag = 'scoped memory for tpu_custom_call.1']
    #allocation5 [shape = 'u8[8192]{0}', space=vmem, size = 0x2000, scoped, tag = 'input window, operand 1, single buffered']
    #allocation6 [shape = 's32[1]{0}', space=sflag, size = 0x4, scoped, tag = 'scoped memory for tpu_custom_call.1']
    #allocation7 [shape = 'u8[32768]{0}', space=vmem, size = 0x8000, scoped, tag = 'input window, operand 3, single buffered']
    #allocation8 [shape = 'u8[32768]{0}', space=vmem, size = 0x8000, scoped, tag = 'input window, operand 5, single buffered']
    #allocation9 [shape = 's32[1]{0}', space=sflag, size = 0x4, scoped, tag = 'scoped memory for tpu_custom_call.1']
    #allocation10 [shape = 'u8[16384]{0}', space=vmem, size = 0x4000, scoped, tag = 'output window, operand 0, single buffered']
    %12 = vsyncpa [#allocation3], 0
    %13 = vsyncpa [#allocation6], 0
    %14 = vsyncpa [#allocation9], 0
    %15 = vsyncpa [#allocation4], 0
    // Predicated region
    $region2: #{tpu_custom_call.1} parent=1 // pred_check
      _
    $region3: #{tpu_custom_call.1} parent=1 // pred_check_branch
      %17 = sbr.rel (0) target = $region5
    $region4: #{tpu_custom_call.1} parent=1 // pred_region
      %s19 = ssub.s32 512, 512
      %20 = vsyncadd [#allocation3], %s19
      %s21 = sshll.u32 [#allocation2], 4
      %s22 = int_to_ptr.vmem [resolvable:$true] %s21
      %27 = dma.hbm_to_vmem [thread:$0]  %s0, 512, %s22, [#allocation3], 128, 128, 8
    $region5: #{tpu_custom_call.1} parent=1 // pred_fallthru
      _
    // Predicated region
    $region6: #{tpu_custom_call.1} parent=1 // pred_check
      _
    $region7: #{tpu_custom_call.1} parent=1 // pred_check_branch
      %29 = sbr.rel (0) target = $region9
    $region8: #{tpu_custom_call.1} parent=1 // pred_region
      %s31 = ssub.s32 256, 256
      %32 = vsyncadd [#allocation6], %s31
      %s33 = sshll.u32 [#allocation5], 4
      %s34 = int_to_ptr.vmem [resolvable:$true] %s33
      %39 = dma.hbm_to_vmem [thread:$0]  %s1, 256, %s34, [#allocation6], 64, 64, 4
    $region9: #{tpu_custom_call.1} parent=1 // pred_fallthru
      _
    // Predicated region
    $region10: #{tpu_custom_call.1} parent=1 // pred_check
      _
    $region11: #{tpu_custom_call.1} parent=1 // pred_check_branch
      %41 = sbr.rel (0) target = $region13
    $region12: #{tpu_custom_call.1} parent=1 // pred_region
      _
    $region13: #{tpu_custom_call.1} parent=1 // pred_fallthru
      _
    // Predicated region
    $region14: #{tpu_custom_call.1} parent=1 // pred_check
      _
    $region15: #{tpu_custom_call.1} parent=1 // pred_check_branch
      %43 = sbr.rel (0) target = $region17
    $region16: #{tpu_custom_call.1} parent=1 // pred_region
      %s45 = ssub.s32 1024, 1024
      %46 = vsyncadd [#allocation6], %s45
      %s47 = sshll.u32 [#allocation7], 4
      %s48 = int_to_ptr.vmem [resolvable:$true] %s47
      %53 = dma.hbm_to_vmem [thread:$0]  %s3, 1024, %s48, [#allocation6], 64, 64, 4
    $region17: #{tpu_custom_call.1} parent=1 // pred_fallthru
      _
    // Predicated region
    $region18: #{tpu_custom_call.1} parent=1 // pred_check
      _
    $region19: #{tpu_custom_call.1} parent=1 // pred_check_branch
      %55 = sbr.rel (0) target = $region21
    $region20: #{tpu_custom_call.1} parent=1 // pred_region
      _
    $region21: #{tpu_custom_call.1} parent=1 // pred_fallthru
      _
    // Predicated region
    $region22: #{tpu_custom_call.1} parent=1 // pred_check
      _
    $region23: #{tpu_custom_call.1} parent=1 // pred_check_branch
      %57 = sbr.rel (0) target = $region25
    $region24: #{tpu_custom_call.1} parent=1 // pred_region
      %s59 = ssub.s32 1024, 1024
      %60 = vsyncadd [#allocation9], %s59
      %s61 = sshll.u32 [#allocation8], 4
      %s62 = int_to_ptr.vmem [resolvable:$true] %s61
      %67 = dma.hbm_to_vmem [thread:$0]  %s5, 1024, %s62, [#allocation9], 64, 64, 4
    $region25: #{tpu_custom_call.1} parent=1 // pred_fallthru
      _
    // Predicated region
    $region26: #{tpu_custom_call.1} parent=1 // pred_check
      _
    $region27: #{tpu_custom_call.1} parent=1 // pred_check_branch
      %69 = sbr.rel (0) target = $region29
    $region28: #{tpu_custom_call.1} parent=1 // pred_region
      _
    $region29: #{tpu_custom_call.1} parent=1 // pred_fallthru
      _
    // Predicated region
    $region30: #{tpu_custom_call.1} parent=1 // pred_check
      _
    $region31: #{tpu_custom_call.1} parent=1 // pred_check_branch
      %71 = sbr.rel (0) target = $region33
    $region32: #{tpu_custom_call.1} parent=1 // pred_region
      %72 = dma.done [#allocation3], 512
    $region33: #{tpu_custom_call.1} parent=1 // pred_fallthru
      _
    // Predicated region
    $region34: #{tpu_custom_call.1} parent=1 // pred_check
      _
    $region35: #{tpu_custom_call.1} parent=1 // pred_check_branch
      %74 = sbr.rel (0) target = $region37
    $region36: #{tpu_custom_call.1} parent=1 // pred_region
      %75 = dma.done [#allocation6], 256
    $region37: #{tpu_custom_call.1} parent=1 // pred_fallthru
      _
    // Predicated region
    $region38: #{tpu_custom_call.1} parent=1 // pred_check
      _
    $region39: #{tpu_custom_call.1} parent=1 // pred_check_branch
      %77 = sbr.rel (0) target = $region41
    $region40: #{tpu_custom_call.1} parent=1 // pred_region
      %78 = dma.done [#allocation6], 1024
    $region41: #{tpu_custom_call.1} parent=1 // pred_fallthru
      _
    // Predicated region
    $region42: #{tpu_custom_call.1} parent=1 // pred_check
      _
    $region43: #{tpu_custom_call.1} parent=1 // pred_check_branch
      %80 = sbr.rel (0) target = $region45
    $region44: #{tpu_custom_call.1} parent=1 // pred_region
      %81 = dma.done [#allocation9], 1024
    $region45: #{tpu_custom_call.1} parent=1 // pred_fallthru
      _
    %v83 = vld [vmem:[#allocation2] sm:$0xff]
    %v84 = vld [vmem:[#allocation2 + $0x8] sm:$0xff]
    %v85 = vld [vmem:[#allocation2 + $0x10] sm:$0xff]
    %v86 = vld [vmem:[#allocation2 + $0x18] sm:$0xff]
    %v87 = vpack.c.bf16 %v84, %v83
    %v88 = vpack.c.bf16 %v86, %v85
    %v89 = vld [vmem:[#allocation5] sm:$0xf]
    %v90 = vld [vmem:[#allocation5 + $0x4] sm:$0xf]
    %v91 = vld [vmem:[#allocation5 + $0x8] sm:$0xf]
    %v92 = vld [vmem:[#allocation5 + $0xc] sm:$0xf]
    %v93 = vld [vmem:[%s2] sm:$0x1]
    %v95 = vlaneseq
    %v96 = vshrl.u32 %v95, 7
    %v97 = vsub.s32 0, %v96
    %v98 = vrot.slane %v93, %v97
    %v104 = vunpack.c.l.b16 %v89
    %v105 = vunpack.c.l.b16 %v90
    %v106 = vunpack.c.l.b16 %v91
    %v107 = vunpack.c.l.b16 %v92
    %v108 = vpack.c.b16 %v105, %v104
    %v109 = vpack.c.b16 %v107, %v106
    %vm112 = vcmask 261120
    %v114 = vsel %vm112, %v87, 0
    %v117 = vsel %vm112, %v88, 0
    %119 = vmatprep.subr.bf16.mxu0 0
    %120 = vmatpush1.bf16.msra.mxu0 %v108
    %121 = vmatprep.subr.bf16.mxu0 0
    %122 = vmatpush1.bf16.msra.mxu0 %v109
    %123 = vmatprep.subr.bf16.mxu0 0
    %124 = vmatpush1.bf16.msra.mxu0 0
    %125 = vmatprep.subr.bf16.mxu0 0
    %126 = vmatpush1.bf16.msra.mxu0 0
    %127 = vmatprep.subr.bf16.mxu0 0
    %128 = vmatpush1.bf16.msra.mxu0 0
    %129 = vmatprep.subr.bf16.mxu0 0
    %130 = vmatpush1.bf16.msra.mxu0 0
    %131 = vmatprep.subr.bf16.mxu0 0
    %132 = vmatpush1.bf16.msra.mxu0 0
    %133 = vmatprep.subr.bf16.mxu0 0
    %134 = vmatpush1.bf16.msra.mxu0 0
    %135 = vmatprep.subr.bf16.mxu0 0
    %136 = vmatpush1.bf16.msra.mxu0 0
    %137 = vmatprep.subr.bf16.mxu0 0
    %138 = vmatpush1.bf16.msra.mxu0 0
    %139 = vmatprep.subr.bf16.mxu0 0
    %140 = vmatpush1.bf16.msra.mxu0 0
    %141 = vmatprep.subr.bf16.mxu0 0
    %142 = vmatpush1.bf16.msra.mxu0 0
    %143 = vmatprep.subr.bf16.mxu0 0
    %144 = vmatpush1.bf16.msra.mxu0 0
    %145 = vmatprep.subr.bf16.mxu0 0
    %146 = vmatpush1.bf16.msra.mxu0 0
    %147 = vmatprep.subr.bf16.mxu0 0
    %148 = vmatpush1.bf16.msra.mxu0 0
    %149 = vmatprep.subr.bf16.mxu0 0
    %150 = vmatpush1.bf16.msra.mxu0 0
    %151 = vmatprep.mubr.bf16.mxu0 0
    %152 = vmatmul.mubr.bf16.gmra.mrb[0].mxu0 %v114
    %v153 = vpop.f32.mrb[0].mxu0
    %v154 = vadd.f32 %v98, %v153
    %v155 = vpop.f32.mrb[0].mxu0
    %v156 = vpop.f32.mrb[0].mxu0
    %v157 = vadd.f32 %v98, %v156
    %v158 = vpop.f32.mrb[0].mxu0
    %159 = vmatprep.mubr.bf16.mxu0 0
    %160 = vmatmul.mubr.bf16.gmra.mrb[0].mxu0 %v117
    %v161 = vpop.f32.mrb[0].mxu0
    %v162 = vadd.f32 %v98, %v161
    %v163 = vpop.f32.mrb[0].mxu0
    %v164 = vpop.f32.mrb[0].mxu0
    %v165 = vadd.f32 %v98, %v164
    %v166 = vpop.f32.mrb[0].mxu0
    %167 = vdwg.mxu0
    %v168 = vmul.f32 %v154, 0.01
    %v169 = vmul.f32 %v157, 0.01
    %v170 = vmul.f32 %v162, 0.01
    %v171 = vmul.f32 %v165, 0.01
    %v172 = vmax.f32 %v154, %v168
    %v173 = vmax.f32 %v157, %v169
    %v174 = vmax.f32 %v162, %v170
    %v175 = vmax.f32 %v165, %v171
    %v176 = vpack.c.bf16 %v173, %v172
    %v177 = vpack.c.bf16 %v175, %v174
    %v178 = vld [vmem:[#allocation7] sm:$0xf]
    %v179 = vld [vmem:[#allocation7 + $0x4] sm:$0xf]
    %v180 = vld [vmem:[#allocation7 + $0x8] sm:$0xf]
    %v181 = vld [vmem:[#allocation7 + $0xc] sm:$0xf]
    %v182 = vld [vmem:[#allocation7 + $0x10] sm:$0xf]
    %v183 = vld [vmem:[#allocation7 + $0x14] sm:$0xf]
    %v184 = vld [vmem:[#allocation7 + $0x18] sm:$0xf]
    %v185 = vld [vmem:[#allocation7 + $0x1c] sm:$0xf]
    %v186 = vld [vmem:[#allocation7 + $0x20] sm:$0xf]
    %v187 = vld [vmem:[#allocation7 + $0x24] sm:$0xf]
    %v188 = vld [vmem:[#allocation7 + $0x28] sm:$0xf]
    %v189 = vld [vmem:[#allocation7 + $0x2c] sm:$0xf]
    %v190 = vld [vmem:[#allocation7 + $0x30] sm:$0xf]
    %v191 = vld [vmem:[#allocation7 + $0x34] sm:$0xf]
    %v192 = vld [vmem:[#allocation7 + $0x38] sm:$0xf]
    %v193 = vld [vmem:[#allocation7 + $0x3c] sm:$0xf]
    %v194 = vld [vmem:[%s4] sm:$0x1]
    %v196 = vlaneseq
    %v197 = vshrl.u32 %v196, 7
    %v198 = vsub.s32 0, %v197
    %v199 = vrot.slane %v194, %v198
    %v217 = vunpack.c.l.b16 %v178
    %v218 = vunpack.c.l.b16 %v179
    %v219 = vunpack.c.l.b16 %v180
    %v220 = vunpack.c.l.b16 %v181
    %v221 = vunpack.c.l.b16 %v182
    %v222 = vunpack.c.l.b16 %v183
    %v223 = vunpack.c.l.b16 %v184
    %v224 = vunpack.c.l.b16 %v185
    %v225 = vunpack.c.l.b16 %v186
    %v226 = vunpack.c.l.b16 %v187
    %v227 = vunpack.c.l.b16 %v188
    %v228 = vunpack.c.l.b16 %v189
    %v229 = vunpack.c.l.b16 %v190
    %v230 = vunpack.c.l.b16 %v191
    %v231 = vunpack.c.l.b16 %v192
    %v232 = vunpack.c.l.b16 %v193
    %v233 = vpack.c.b16 %v218, %v217
    %v234 = vpack.c.b16 %v220, %v219
    %v235 = vpack.c.b16 %v222, %v221
    %v236 = vpack.c.b16 %v224, %v223
    %v237 = vpack.c.b16 %v226, %v225
    %v238 = vpack.c.b16 %v228, %v227
    %v239 = vpack.c.b16 %v230, %v229
    %v240 = vpack.c.b16 %v232, %v231
    %249 = vmatprep.subr.bf16.mxu0 0
    %250 = vmatpush1.bf16.msra.mxu0 %v233
    %251 = vmatprep.subr.bf16.mxu0 0
    %252 = vmatpush1.bf16.msra.mxu0 %v234
    %253 = vmatprep.subr.bf16.mxu0 0
    %254 = vmatpush1.bf16.msra.mxu0 %v235
    %255 = vmatprep.subr.bf16.mxu0 0
    %256 = vmatpush1.bf16.msra.mxu0 %v236
    %257 = vmatprep.subr.bf16.mxu0 0
    %258 = vmatpush1.bf16.msra.mxu0 %v237
    %259 = vmatprep.subr.bf16.mxu0 0
    %260 = vmatpush1.bf16.msra.mxu0 %v238
    %261 = vmatprep.subr.bf16.mxu0 0
    %262 = vmatpush1.bf16.msra.mxu0 %v239
    %263 = vmatprep.subr.bf16.mxu0 0
    %264 = vmatpush1.bf16.msra.mxu0 %v240
    %265 = vmatprep.subr.bf16.mxu0 0
    %266 = vmatpush1.bf16.msra.mxu0 0
    %267 = vmatprep.subr.bf16.mxu0 0
    %268 = vmatpush1.bf16.msra.mxu0 0
    %269 = vmatprep.subr.bf16.mxu0 0
    %270 = vmatpush1.bf16.msra.mxu0 0
    %271 = vmatprep.subr.bf16.mxu0 0
    %272 = vmatpush1.bf16.msra.mxu0 0
    %273 = vmatprep.subr.bf16.mxu0 0
    %274 = vmatpush1.bf16.msra.mxu0 0
    %275 = vmatprep.subr.bf16.mxu0 0
    %276 = vmatpush1.bf16.msra.mxu0 0
    %277 = vmatprep.subr.bf16.mxu0 0
    %278 = vmatpush1.bf16.msra.mxu0 0
    %279 = vmatprep.subr.bf16.mxu0 0
    %280 = vmatpush1.bf16.msra.mxu0 0
    %281 = vmatprep.mubr.bf16.mxu0 0
    %282 = vmatmul.mubr.bf16.gmra.mrb[0].mxu0 %v176
    %v283 = vpop.f32.mrb[0].mxu0
    %v284 = vadd.f32 %v199, %v283
    %v285 = vpop.f32.mrb[0].mxu0
    %v286 = vpop.f32.mrb[0].mxu0
    %v287 = vadd.f32 %v199, %v286
    %v288 = vpop.f32.mrb[0].mxu0
    %289 = vmatprep.mubr.bf16.mxu0 0
    %290 = vmatmul.mubr.bf16.gmra.mrb[0].mxu0 %v177
    %v291 = vpop.f32.mrb[0].mxu0
    %v292 = vadd.f32 %v199, %v291
    %v293 = vpop.f32.mrb[0].mxu0
    %v294 = vpop.f32.mrb[0].mxu0
    %v295 = vadd.f32 %v199, %v294
    %v296 = vpop.f32.mrb[0].mxu0
    %297 = vdwg.mxu0
    %v298 = vmul.f32 %v284, 0.01
    %v299 = vmul.f32 %v287, 0.01
    %v300 = vmul.f32 %v292, 0.01
    %v301 = vmul.f32 %v295, 0.01
    %v302 = vmax.f32 %v284, %v298
    %v303 = vmax.f32 %v287, %v299
    %v304 = vmax.f32 %v292, %v300
    %v305 = vmax.f32 %v295, %v301
    %v306 = vpack.c.bf16 %v303, %v302
    %v307 = vpack.c.bf16 %v305, %v304
    %v308 = vld [vmem:[#allocation8] sm:$0xf]
    %v309 = vld [vmem:[#allocation8 + $0x4] sm:$0xf]
    %v310 = vld [vmem:[#allocation8 + $0x8] sm:$0xf]
    %v311 = vld [vmem:[#allocation8 + $0xc] sm:$0xf]
    %v312 = vld [vmem:[#allocation8 + $0x10] sm:$0xf]
    %v313 = vld [vmem:[#allocation8 + $0x14] sm:$0xf]
    %v314 = vld [vmem:[#allocation8 + $0x18] sm:$0xf]
    %v315 = vld [vmem:[#allocation8 + $0x1c] sm:$0xf]
    %v316 = vld [vmem:[#allocation8 + $0x20] sm:$0xf]
    %v317 = vld [vmem:[#allocation8 + $0x24] sm:$0xf]
    %v318 = vld [vmem:[#allocation8 + $0x28] sm:$0xf]
    %v319 = vld [vmem:[#allocation8 + $0x2c] sm:$0xf]
    %v320 = vld [vmem:[#allocation8 + $0x30] sm:$0xf]
    %v321 = vld [vmem:[#allocation8 + $0x34] sm:$0xf]
    %v322 = vld [vmem:[#allocation8 + $0x38] sm:$0xf]
    %v323 = vld [vmem:[#allocation8 + $0x3c] sm:$0xf]
    %v324 = vld [vmem:[%s6] sm:$0x1]
    %v326 = vlaneseq
    %v327 = vshrl.u32 %v326, 7
    %v328 = vsub.s32 0, %v327
    %v329 = vrot.slane %v324, %v328
    %v347 = vunpack.c.l.b16 %v308
    %v348 = vunpack.c.l.b16 %v309
    %v349 = vunpack.c.l.b16 %v310
    %v350 = vunpack.c.l.b16 %v311
    %v351 = vunpack.c.l.b16 %v312
    %v352 = vunpack.c.l.b16 %v313
    %v353 = vunpack.c.l.b16 %v314
    %v354 = vunpack.c.l.b16 %v315
    %v355 = vunpack.c.l.b16 %v316
    %v356 = vunpack.c.l.b16 %v317
    %v357 = vunpack.c.l.b16 %v318
    %v358 = vunpack.c.l.b16 %v319
    %v359 = vunpack.c.l.b16 %v320
    %v360 = vunpack.c.l.b16 %v321
    %v361 = vunpack.c.l.b16 %v322
    %v362 = vunpack.c.l.b16 %v323
    %v363 = vpack.c.b16 %v348, %v347
    %v364 = vpack.c.b16 %v350, %v349
    %v365 = vpack.c.b16 %v352, %v351
    %v366 = vpack.c.b16 %v354, %v353
    %v367 = vpack.c.b16 %v356, %v355
    %v368 = vpack.c.b16 %v358, %v357
    %v369 = vpack.c.b16 %v360, %v359
    %v370 = vpack.c.b16 %v362, %v361
    %379 = vmatprep.subr.bf16.mxu0 0
    %380 = vmatpush1.bf16.msra.mxu0 %v363
    %381 = vmatprep.subr.bf16.mxu0 0
    %382 = vmatpush1.bf16.msra.mxu0 %v364
    %383 = vmatprep.subr.bf16.mxu0 0
    %384 = vmatpush1.bf16.msra.mxu0 %v365
    %385 = vmatprep.subr.bf16.mxu0 0
    %386 = vmatpush1.bf16.msra.mxu0 %v366
    %387 = vmatprep.subr.bf16.mxu0 0
    %388 = vmatpush1.bf16.msra.mxu0 %v367
    %389 = vmatprep.subr.bf16.mxu0 0
    %390 = vmatpush1.bf16.msra.mxu0 %v368
    %391 = vmatprep.subr.bf16.mxu0 0
    %392 = vmatpush1.bf16.msra.mxu0 %v369
    %393 = vmatprep.subr.bf16.mxu0 0
    %394 = vmatpush1.bf16.msra.mxu0 %v370
    %395 = vmatprep.subr.bf16.mxu0 0
    %396 = vmatpush1.bf16.msra.mxu0 0
    %397 = vmatprep.subr.bf16.mxu0 0
    %398 = vmatpush1.bf16.msra.mxu0 0
    %399 = vmatprep.subr.bf16.mxu0 0
    %400 = vmatpush1.bf16.msra.mxu0 0
    %401 = vmatprep.subr.bf16.mxu0 0
    %402 = vmatpush1.bf16.msra.mxu0 0
    %403 = vmatprep.subr.bf16.mxu0 0
    %404 = vmatpush1.bf16.msra.mxu0 0
    %405 = vmatprep.subr.bf16.mxu0 0
    %406 = vmatpush1.bf16.msra.mxu0 0
    %407 = vmatprep.subr.bf16.mxu0 0
    %408 = vmatpush1.bf16.msra.mxu0 0
    %409 = vmatprep.subr.bf16.mxu0 0
    %410 = vmatpush1.bf16.msra.mxu0 0
    %411 = vmatprep.mubr.bf16.mxu0 0
    %412 = vmatmul.mubr.bf16.gmra.mrb[0].mxu0 %v306
    %v413 = vpop.f32.mrb[0].mxu0
    %v414 = vadd.f32 %v329, %v413
    %v415 = vpop.f32.mrb[0].mxu0
    %v416 = vpop.f32.mrb[0].mxu0
    %v417 = vadd.f32 %v329, %v416
    %v418 = vpop.f32.mrb[0].mxu0
    %419 = vmatprep.mubr.bf16.mxu0 0
    %420 = vmatmul.mubr.bf16.gmra.mrb[0].mxu0 %v307
    %v421 = vpop.f32.mrb[0].mxu0
    %v422 = vadd.f32 %v329, %v421
    %v423 = vpop.f32.mrb[0].mxu0
    %v424 = vpop.f32.mrb[0].mxu0
    %v425 = vadd.f32 %v329, %v424
    %v426 = vpop.f32.mrb[0].mxu0
    %427 = vdwg.mxu0
    %428 = vst [vmem:[#allocation10] sm:$0xff] %v414
    %429 = vst [vmem:[#allocation10 + $0x8] sm:$0xff] %v417
    %430 = vst [vmem:[#allocation10 + $0x10] sm:$0xff] %v422
    %431 = vst [vmem:[#allocation10 + $0x18] sm:$0xff] %v425
    // Predicated region
    $region46: #{tpu_custom_call.1} parent=1 // pred_check
      _
    $region47: #{tpu_custom_call.1} parent=1 // pred_check_branch
      %433 = sbr.rel (0) target = $region49
    $region48: #{tpu_custom_call.1} parent=1 // pred_region
      %s435 = ssub.s32 512, 512
      %436 = vsyncadd [#allocation4], %s435
      %s437 = sshll.u32 [#allocation10], 4
      %s438 = int_to_ptr.vmem [resolvable:$true] %s437
      %443 = dma.vmem_to_hbm [thread:$0]  %s438, 512, %s7, [#allocation4], 128, 128, 8
    $region49: #{tpu_custom_call.1} parent=1 // pred_fallthru
      _
    // Predicated region
    $region50: #{tpu_custom_call.1} parent=1 // pred_check
      _
    $region51: #{tpu_custom_call.1} parent=1 // pred_check_branch
      %445 = sbr.rel (0) target = $region53
    $region52: #{tpu_custom_call.1} parent=1 // pred_region
      %446 = dma.done [#allocation4], 512
    $region53: #{tpu_custom_call.1} parent=1 // pred_fallthru
      _
    %447 = vsyncpa [#allocation3], 1
    %448 = vsyncpa [#allocation6], 1
    %449 = vsyncpa [#allocation9], 1
    %450 = vsyncpa [#allocation4], 1

</llo_original>
